<compile_context>
chip_gen: v5e
topology: v5e:2x2
jax: 0.10.0
libtpu: 0.0.40
codegen_flags: <defaults>
</compile_context>

<pallas_src>
import math

import jax
import jax.numpy as jnp
from jax import lax
from jax.experimental import pallas as pl
from jax.experimental.pallas import tpu as pltpu


def _round_up(v, m):
    return ((v + m - 1) // m) * m


_TARGET_OUT_TILE = 4 << 20      # ~4 MiB f32 output slab per grid step
_COMPUTE_DTYPE = jnp.bfloat16   # operands of T @ T^T (f32 accumulation)


# ------------------------------ kernel bodies -------------------------------

def _proj_kernel(x_ref, w_ref, t_ref):
    # x_ref: (1, N_p, F_in) f32   w_ref: (F_in, F_out) f32   t_ref: (1, N_p, F_out) bf16
    t = jnp.dot(x_ref[0], w_ref[...], preferred_element_type=jnp.float32)
    t_ref[0] = t.astype(t_ref.dtype)


def _attn_kernel(tr_ref, tc_ref, out_ref):
    # tr_ref : (Bb, TM, F_out)  bf16 row slice of T
    # tc_ref : (Bb, N_p, F_out) bf16 whole T for this batch block (DMA'd once per block)
    # out_ref: (Bb, TM, N_p)    f32
    a = lax.dot_general(
        tr_ref[...], tc_ref[...],
        dimension_numbers=(((2,), (2,)), ((0,), (0,))),   # batched "NT": no transpose
        preferred_element_type=jnp.float32,
    )
    out_ref[...] = jnp.maximum(a, 0.0).astype(out_ref.dtype)


# ------------------------------ wrapper --------------------------------------

def relation_attention(inputdata, W):
    """relu((x @ W) @ (x @ W)^T).

    inputdata: (B, N, F_in) float32
    W        : (F_in, F_out) float32
    returns  : (B, N, N) float32
    """
    B, N, F_in = inputdata.shape
    F_in_w, F_out = W.shape
    assert F_in == F_in_w, (F_in, F_in_w)

    # Lane-dense output: pad N to a multiple of 128 only (never pay extra output
    # bytes for MXU alignment when write-bound).
    N_p = _round_up(max(N, 128), 128)

    x_p = inputdata
    if N_p != N:
        x_p = jnp.zeros((B, N_p, F_in), inputdata.dtype).at[:, :N, :].set(inputdata)

    # ---- stage 1: T = x @ W, emitted once in bf16 ---------------------------
    t = pl.pallas_call(
        _proj_kernel,
        out_shape=jax.ShapeDtypeStruct((B, N_p, F_out), _COMPUTE_DTYPE),
        grid_spec=pltpu.PrefetchScalarGridSpec(
            num_scalar_prefetch=0,
            grid=(B,),
            in_specs=[
                pl.BlockSpec((1, N_p, F_in), lambda b: (b, 0, 0)),
                pl.BlockSpec((F_in, F_out), lambda b: (0, 0)),
            ],
            out_specs=pl.BlockSpec((1, N_p, F_out), lambda b: (b, 0, 0)),
        ),
        compiler_params=pltpu.CompilerParams(dimension_semantics=("parallel",)),
        cost_estimate=pl.CostEstimate(
            flops=int(2 * B * N_p * F_in * F_out),
            transcendentals=0,
            bytes_accessed=int(B * N_p * F_in * 4 + F_in * F_out * 4
                               + B * N_p * F_out * 2),
        ),
    )(x_p, W)

    # ---- stage 2: relu(T @ T^T), HBM-write bound ----------------------------
    # Full-width column tile (one fully contiguous HBM slab per row tile per
    # batch element); pick the largest row tile / batch block whose f32 output
    # slab is ~4 MiB per grid step.
    TN = N_p
    TM = 8
    for d in range(8, N_p + 1, 8):          # multiple-of-8 divisors of N_p
        if N_p % d == 0 and d * N_p * 4 <= _TARGET_OUT_TILE:
            TM = d
    Bb = 1
    if TM == N_p:
        Bb = min(B, max(1, _TARGET_OUT_TILE // (N_p * N_p * 4)))
        while B % Bb != 0:                  # never pad the batch axis
            Bb -= 1

    grid = (B // Bb, N_p // TM)

    # VMEM budget: double-buffered blocks + one f32 matmul intermediate;
    # cap below v7x physical VMEM (64 MiB).
    bytes_tr = Bb * TM * F_out * 2
    bytes_tc = Bb * N_p * F_out * 2
    bytes_out = Bb * TM * TN * 4
    per_step = 2 * (bytes_tr + bytes_tc + bytes_out) + bytes_out
    vmem_limit = int(max(32 << 20, min(48 << 20, int(1.5 * per_step))))

    cost = pl.CostEstimate(
        flops=int(2 * B * N_p * N_p * F_out),
        transcendentals=0,
        # T read twice (row stream + one whole-T copy per batch block, both bf16);
        # the (B, N_p, N_p) f32 output write dominates.
        bytes_accessed=int(2 * B * N_p * F_out * 2 + B * N_p * N_p * 4),
    )

    out_p = pl.pallas_call(
        _attn_kernel,
        out_shape=jax.ShapeDtypeStruct((B, N_p, N_p), jnp.float32),
        grid_spec=pltpu.PrefetchScalarGridSpec(
            num_scalar_prefetch=0,
            grid=grid,
            in_specs=[
                pl.BlockSpec((Bb, TM, F_out), lambda b, i: (b, i, 0)),   # rows of T
                pl.BlockSpec((Bb, N_p, F_out), lambda b, i: (b, 0, 0)),  # whole T
            ],
            out_specs=pl.BlockSpec((Bb, TM, TN), lambda b, i: (b, i, 0)),
        ),
        compiler_params=pltpu.CompilerParams(
            dimension_semantics=("parallel", "parallel"),
            vmem_limit_bytes=vmem_limit,
        ),
        cost_estimate=cost,
    )(t, t)

    return out_p[:, :N, :N]


# ------------------------------ test helpers --------------------------------

def xavier_uniform(key, shape, dtype=jnp.float32):
    fan_in, fan_out = shape
    bound = math.sqrt(6.0 / (fan_in + fan_out))
    return jax.random.uniform(key, shape, dtype=dtype, minval=-bound, maxval=bound)


def _reference_f32(x, w):
    t = jnp.einsum("bnf,fo->bno", x, w)
    return jnp.maximum(jnp.einsum("bno,bmo->bnm", t, t), 0.0)


def _reference_bf16(x, w):
    # Mirrors the kernel's numerics: bf16 T operands, f32 accumulation.
    t = jnp.einsum("bnf,fo->bno", x, w).astype(jnp.bfloat16)
    a = jnp.einsum("bno,bmo->bnm", t, t, preferred_element_type=jnp.float32)
    return jnp.maximum(a, 0.0)


if __name__ == "__main__":
    key = jax.random.PRNGKey(0)
    k_x, k_w, k_x2 = jax.random.split(key, 3)

    # Small, deterministic example consistent with the module's forward pass.
    B, N, in_features, out_features = 2, 16, 8, 32
    x = jax.random.normal(k_x, (B, N, in_features), dtype=jnp.float32)
    W = xavier_uniform(k_w, (in_features, out_features))

    out = jax.block_until_ready(relation_attention(x, W))
    assert out.shape == (B, N, N)
    assert jnp.allclose(out, _reference_bf16(x, W), atol=1e-2, rtol=1e-2)
    assert jnp.allclose(out, _reference_f32(x, W), atol=1e-1, rtol=1e-1)

    # Second shape exercises N padding (300 -> 384) and batch blocking (Bb=3,
    # whole output written in a single contiguous grid step).
    B2, N2 = 3, 300
    x2 = jax.random.normal(k_x2, (B2, N2, in_features), dtype=jnp.float32)
    out2 = jax.block_until_ready(relation_attention(x2, W))
    assert out2.shape == (B2, N2, N2)
    assert jnp.allclose(out2, _reference_bf16(x2, W), atol=1e-2, rtol=1e-2)
    assert jnp.allclose(out2, _reference_f32(x2, W), atol=1e-1, rtol=1e-1)

    print("KERNEL_OK")
</pallas_src>

<mosaic_0001>
module attributes {stable_mosaic.version = 11 : i64} {
  func.func @_proj_kernel(%arg0: i32, %arg1: memref<1x128x8xf32, #tpu.memory_space<vmem>>, %arg2: memref<8x32xf32, #tpu.memory_space<vmem>>, %arg3: memref<1x128x32xbf16, #tpu.memory_space<vmem>>) attributes {dimension_semantics = [#tpu.dimension_semantics<parallel>], iteration_bounds = array<i64: 2>, scalar_prefetch = 0 : i64, scratch_operands = 0 : i64, tpu.core_type = #tpu.core_type<tc>, window_params = [{transform_indices = @transform_0, window_bounds = array<i64: 1, 128, 8>}, {pipeline_mode = #tpu.pipeline_mode<synchronous>, transform_indices = @transform_1, window_bounds = array<i64: 8, 32>}, {transform_indices = @transform_2, window_bounds = array<i64: 1, 128, 32>}]} {
    %c0 = arith.constant 0 : index
    %c0_0 = arith.constant 0 : index
    %c0_1 = arith.constant 0 : index
    %0 = vector.load %arg1[%c0, %c0_0, %c0_1] : memref<1x128x8xf32, #tpu.memory_space<vmem>>, vector<1x128x8xf32>
    %1 = vector.shape_cast %0 : vector<1x128x8xf32> to vector<128x8xf32>
    %c0_2 = arith.constant 0 : index
    %c0_3 = arith.constant 0 : index
    %2 = vector.load %arg2[%c0_2, %c0_3] : memref<8x32xf32, #tpu.memory_space<vmem>>, vector<8x32xf32>
    %cst = arith.constant dense<0.000000e+00> : vector<128x32xf32>
    %3 = tpu.matmul %1, %2, %cst {dimension_numbers = #tpu.dot_dimension_numbers<[1], [0], [0], [1], [0, 0, 1, 1], [], []>} : vector<128x8xf32>, vector<8x32xf32>, vector<128x32xf32> -> vector<128x32xf32>
    %4 = arith.truncf %3 : vector<128x32xf32> to vector<128x32xbf16>
    %c0_4 = arith.constant 0 : index
    %c0_5 = arith.constant 0 : index
    %c0_6 = arith.constant 0 : index
    %5 = vector.load %arg3[%c0_4, %c0_5, %c0_6] : memref<1x128x32xbf16, #tpu.memory_space<vmem>>, vector<1x128x32xbf16>
    %6 = vector.shape_cast %5 : vector<1x128x32xbf16> to vector<128x32xbf16>
    %7 = vector.shape_cast %4 : vector<128x32xbf16> to vector<1x128x32xbf16>
    tpu.vector_store %arg3[%c0_4, %c0_5, %c0_6], %7 {strides = array<i32>} : memref<1x128x32xbf16, #tpu.memory_space<vmem>>, vector<1x128x32xbf16>,
    return
  }
  func.func @transform_0(%arg0: i32) -> (i32, i32, i32) {
    %c0_i32 = arith.constant 0 : i32
    %c0_i32_0 = arith.constant 0 : i32
    %c0_i32_1 = arith.constant 0 : i32
    return %arg0, %c0_i32, %c0_i32_0 : i32, i32, i32
  }
  func.func @transform_1(%arg0: i32) -> (i32, i32) {
    %c0_i32 = arith.constant 0 : i32
    %c0_i32_0 = arith.constant 0 : i32
    %c0_i32_1 = arith.constant 0 : i32
    return %c0_i32, %c0_i32_0 : i32, i32
  }
  func.func @transform_2(%arg0: i32) -> (i32, i32, i32) {
    %c0_i32 = arith.constant 0 : i32
    %c0_i32_0 = arith.constant 0 : i32
    %c0_i32_1 = arith.constant 0 : i32
    return %arg0, %c0_i32, %c0_i32_0 : i32, i32, i32
  }
}

</mosaic_0001>

<llo_original>
// kernel: tpu_custom_call.1
$region0: #{tpu_custom_call.1}
  #allocation0 [shape = 'u32[]', space=smem, size = 0x4, offset = 0x4, fixed_abs, tag = 'smem constant byte address 0x4 - core index']
  #allocation1 [shape = 'u32[72,128]{1,0:T(1,128)}', space=vmem, size = 0x9000, scoped, tag = 'internal scratch']
  %s0 = inlined_call_operand.vmem [shape: f32[2,128,8], index: 0, kind: input, shape index: {}]
  %s1 = inlined_call_operand.vmem [shape: f32[8,32], index: 1, kind: input, shape index: {}]
  %s2 = inlined_call_operand.vmem [shape: bf16[2,128,32], index: 2, kind: output, shape index: {}]
  %s3 = sld [smem:[#allocation0]]
  $region41: #{tpu_custom_call.1} parent=0
    _
  %s5 = ssub.s32 1, %s3
  %s6 = scalar_select 0, %s5, %s3
  loop: start=0, step=1, limit=4
  $region2: #{tpu_custom_call.1} parent=0 // loop_pre_header
    _
  $region3: #{tpu_custom_call.1} parent=0 // loop_header
    %s8 = sphi 0, %s12
    %p9 = scmp.ge.s32.totalorder %s8, 4
    %s18 = sphi 0, %s20
    %s21 = sphi 0, %s18
    %s22 = sphi 0, %s21
    %s38 = sphi 0, %s22
    %s42 = sphi 0, %s42
    %s44 = sphi 0, %s42
    %s45 = sphi 0, %s44
    %s59 = sphi 0, %s45
    %s65 = sphi 0, %s67
    %s68 = sphi 0, %s65
    %s69 = sphi 0, %s68
    %s85 = sphi 0, %s69
  $region4: #{tpu_custom_call.1} parent=0 // loop_header_branch
    %11 = sbr.rel (%p9) target = $region8
  $region5: #{tpu_custom_call.1} parent=0 // loop_body
    %s13 = ssub.s32 %s8, 1
    %s14 = ssub.s32 %s8, 2
    %s15 = sadd.s32 %s8, 1
    %s16 = ssub.s32 %s8, %s15
    %p17 = scmp.eq.s32.totalorder %s16, 0
    %s19 = sadd.s32 %s18, 1
    %s20 = scalar_select %p17, %s18, %s19
    %p23 = pneg %p17
    %p24 = scmp.eq.s32.totalorder %s8, 1
    %p25 = por %p23, %p24
    %p26 = scmp.ne.s32.totalorder %s18, %s21
    %p27 = scmp.eq.s32.totalorder %s8, 0
    %p28 = por %p26, %p27
    %p29 = scmp.ne.s32.totalorder %s18, %s21
    %p30 = scmp.eq.s32.totalorder %s13, 1
    %p31 = por %p29, %p30
    %p32 = scmp.ne.s32.totalorder %s21, %s22
    %p33 = scmp.eq.s32.totalorder %s13, 0
    %p34 = por %p32, %p33
    %p35 = scmp.ne.s32.totalorder %s21, %s22
    %p36 = scmp.eq.s32.totalorder %s14, 1
    %p37 = por %p35, %p36
    %p39 = scmp.ne.s32.totalorder %s22, %s38
    %p40 = scmp.eq.s32.totalorder %s14, 0
    %p41 = por %p39, %p40
    %s43 = sadd.s32 %s42, 1
    %p46 = scmp.eq.s32.totalorder %s8, 1
    %p47 = scmp.ne.s32.totalorder %s42, %s44
    %p48 = scmp.eq.s32.totalorder %s8, 0
    %p49 = por %p47, %p48
    %p50 = scmp.ne.s32.totalorder %s42, %s44
    %p51 = scmp.eq.s32.totalorder %s13, 1
    %p52 = por %p50, %p51
    %p53 = scmp.ne.s32.totalorder %s44, %s45
    %p54 = scmp.eq.s32.totalorder %s13, 0
    %p55 = por %p53, %p54
    %p56 = scmp.ne.s32.totalorder %s44, %s45
    %p57 = scmp.eq.s32.totalorder %s14, 1
    %p58 = por %p56, %p57
    %p60 = scmp.ne.s32.totalorder %s45, %s59
    %p61 = scmp.eq.s32.totalorder %s14, 0
    %p62 = por %p60, %p61
    %s63 = ssub.s32 %s8, %s15
    %p64 = scmp.eq.s32.totalorder %s63, 0
    %s66 = sadd.s32 %s65, 1
    %s67 = scalar_select %p64, %s65, %s66
    %p70 = pneg %p64
    %p71 = scmp.eq.s32.totalorder %s8, 1
    %p72 = por %p70, %p71
    %p73 = scmp.ne.s32.totalorder %s65, %s68
    %p74 = scmp.eq.s32.totalorder %s8, 0
    %p75 = por %p73, %p74
    %p76 = scmp.ne.s32.totalorder %s65, %s68
    %p77 = scmp.eq.s32.totalorder %s13, 1
    %p78 = por %p76, %p77
    %p79 = scmp.ne.s32.totalorder %s68, %s69
    %p80 = scmp.eq.s32.totalorder %s13, 0
    %p81 = por %p79, %p80
    %p82 = scmp.ne.s32.totalorder %s68, %s69
    %p83 = scmp.eq.s32.totalorder %s14, 1
    %p84 = por %p82, %p83
    %p86 = scmp.ne.s32.totalorder %s69, %s85
    %p87 = scmp.eq.s32.totalorder %s14, 0
    %p88 = por %p86, %p87
    %p89 = scmp.le.s32.totalorder 1, %s8
    %p90 = scmp.lt.s32.totalorder %s8, 3
    %p91 = pnand %p89, %p90
    %p92 = pneg %p91
    // Predicated region
    $region9: #{tpu_custom_call.1} parent=5 // pred_check
      _
    $region10: #{tpu_custom_call.1} parent=5 // pred_check_branch
      %94 = sbr.rel (%p91) target = $region12
    $region11: #{tpu_custom_call.1} parent=5 // pred_region
      %s95 = ssub.s32 %s8, 1
      // Predicated region
      $region13: #{tpu_custom_call.1} parent=11 // pred_check
        %p96 = pneg %p55
      $region14: #{tpu_custom_call.1} parent=11 // pred_check_branch
        %98 = sbr.rel (%p96) target = $region16
      $region15: #{tpu_custom_call.1} parent=11 // pred_region
        _
      $region16: #{tpu_custom_call.1} parent=11 // pred_fallthru
        _
    $region12: #{tpu_custom_call.1} parent=5 // pred_fallthru
      _
    %p99 = scmp.lt.s32.totalorder %s8, 2
    // Predicated region
    $region17: #{tpu_custom_call.1} parent=5 // pred_check
      %p100 = pneg %p99
    $region18: #{tpu_custom_call.1} parent=5 // pred_check_branch
      %102 = sbr.rel (%p100) target = $region20
    $region19: #{tpu_custom_call.1} parent=5 // pred_region
      // Predicated region
      $region21: #{tpu_custom_call.1} parent=19 // pred_check
        %p103 = pneg %p28
      $region22: #{tpu_custom_call.1} parent=19 // pred_check_branch
        %105 = sbr.rel (%p103) target = $region24
      $region23: #{tpu_custom_call.1} parent=19 // pred_region
        %p106 = scmp.lt.s32.totalorder %s8, 1
        %s107 = scalar_select %p106, %s8, 1
        %s108 = smul.addr %s107, 16
        %s109 = smul.addr %s108, 8
        %s110 = scalar_lea.vmem %s0, %s109
      $region24: #{tpu_custom_call.1} parent=19 // pred_fallthru
        _
    $region20: #{tpu_custom_call.1} parent=5 // pred_fallthru
      _
    %p111 = scmp.le.s32.totalorder 1, %s8
    %p112 = scmp.lt.s32.totalorder %s8, 3
    %p113 = pnand %p111, %p112
    %p114 = pneg %p113
    // Predicated region
    $region25: #{tpu_custom_call.1} parent=5 // pred_check
      _
    $region26: #{tpu_custom_call.1} parent=5 // pred_check_branch
      %116 = sbr.rel (%p113) target = $region28
    $region27: #{tpu_custom_call.1} parent=5 // pred_region
      %s117 = ssub.s32 %s8, 1
      %p118 = scmp.lt.s32.totalorder %s13, 1
      %s119 = scalar_select %p118, %s13, 1
      %s120 = smul.addr %s119, 16
      %s121 = smul.addr %s120, 8
      %s122 = scalar_lea.vmem %s0, %s121
      %p123 = pneg %p34
      %p124 = pneg %p31
      %p125 = pneg %p55
      %p126 = pneg %p52
      %p127 = pneg %p81
      %p128 = pneg %p78
      %p129 = scmp.lt.s32.totalorder %s13, 1
      %s130 = scalar_select %p129, %s13, 1
      %s131 = smul.addr %s130, 16
      %s132 = smul.addr %s131, 4
      %s133 = scalar_lea.vmem %s2, %s132
      %p134 = scmp.lt.s32.totalorder %s13, 1
      %s135 = scalar_select %p134, %s13, 1
      %s136 = smul.addr %s135, 16
      %s137 = smul.addr %s136, 8
      %s138 = scalar_lea.vmem %s0, %s137
      %p139 = scmp.lt.s32.totalorder %s13, 1
      %s140 = scalar_select %p139, %s13, 1
      %s141 = smul.addr %s140, 16
      %s142 = smul.addr %s141, 4
      %s143 = scalar_lea.vmem %s2, %s142
      %v144 = vld [vmem:[%s138] sm:$0xff]
      %v145 = vld [vmem:[%s138 + $0x8] sm:$0xff]
      %v146 = vld [vmem:[%s138 + $0x10] sm:$0xff]
      %v147 = vld [vmem:[%s138 + $0x18] sm:$0xff]
      %v148 = vld [vmem:[%s138 + $0x20] sm:$0xff]
      %v149 = vld [vmem:[%s138 + $0x28] sm:$0xff]
      %v150 = vld [vmem:[%s138 + $0x30] sm:$0xff]
      %v151 = vld [vmem:[%s138 + $0x38] sm:$0xff]
      %v152 = vld [vmem:[%s138 + $0x40] sm:$0xff]
      %v153 = vld [vmem:[%s138 + $0x48] sm:$0xff]
      %v154 = vld [vmem:[%s138 + $0x50] sm:$0xff]
      %v155 = vld [vmem:[%s138 + $0x58] sm:$0xff]
      %v156 = vld [vmem:[%s138 + $0x60] sm:$0xff]
      %v157 = vld [vmem:[%s138 + $0x68] sm:$0xff]
      %v158 = vld [vmem:[%s138 + $0x70] sm:$0xff]
      %v159 = vld [vmem:[%s138 + $0x78] sm:$0xff]
      %v160 = vld [vmem:[%s1] sm:$0xff]
      %vm161 = vcmask 64512
      %v163 = vsel %vm161, %v144, 0
      %v166 = vsel %vm161, %v145, 0
      %v169 = vsel %vm161, %v146, 0
      %v172 = vsel %vm161, %v147, 0
      %v175 = vsel %vm161, %v148, 0
      %v178 = vsel %vm161, %v149, 0
      %v181 = vsel %vm161, %v150, 0
      %v184 = vsel %vm161, %v151, 0
      %v187 = vsel %vm161, %v152, 0
      %v190 = vsel %vm161, %v153, 0
      %v193 = vsel %vm161, %v154, 0
      %v196 = vsel %vm161, %v155, 0
      %v199 = vsel %vm161, %v156, 0
      %v202 = vsel %vm161, %v157, 0
      %v205 = vsel %vm161, %v158, 0
      %v208 = vsel %vm161, %v159, 0
      %210 = vmatpush.msra.mxu0 0.0
      %211 = vmatpush.msra.mxu0 0.0
      %212 = vmatpush.msra.mxu0 0.0
      %213 = vmatpush.msra.mxu0 0.0
      %214 = vmatpush.msra.mxu0 0.0
      %215 = vmatpush.msra.mxu0 0.0
      %216 = vmatpush.msra.mxu0 0.0
      %217 = vmatpush.msra.mxu0 0.0
      %218 = vmatpush.msra.mxu0 0.0
      %219 = vmatpush.msra.mxu0 0.0
      %220 = vmatpush.msra.mxu0 0.0
      %221 = vmatpush.msra.mxu0 0.0
      %222 = vmatpush.msra.mxu0 0.0
      %223 = vmatpush.msra.mxu0 0.0
      %224 = vmatpush.msra.mxu0 0.0
      %225 = vmatpush.msra.mxu0 %v160
      %226 = vmatmul.f32.gmra.mxu0 %v163
      %v227 = vpop.f32.mrf.mxu0
      %v228 = vadd.f32 0.0, %v227
      %229 = vmatmul.f32.gmra.mxu0 %v166
      %v230 = vpop.f32.mrf.mxu0
      %v231 = vadd.f32 0.0, %v230
      %232 = vmatmul.f32.gmra.mxu0 %v169
      %v233 = vpop.f32.mrf.mxu0
      %v234 = vadd.f32 0.0, %v233
      %235 = vmatmul.f32.gmra.mxu0 %v172
      %v236 = vpop.f32.mrf.mxu0
      %v237 = vadd.f32 0.0, %v236
      %238 = vmatmul.f32.gmra.mxu0 %v175
      %v239 = vpop.f32.mrf.mxu0
      %v240 = vadd.f32 0.0, %v239
      %241 = vmatmul.f32.gmra.mxu0 %v178
      %v242 = vpop.f32.mrf.mxu0
      %v243 = vadd.f32 0.0, %v242
      %244 = vmatmul.f32.gmra.mxu0 %v181
      %v245 = vpop.f32.mrf.mxu0
      %v246 = vadd.f32 0.0, %v245
      %247 = vmatmul.f32.gmra.mxu0 %v184
      %v248 = vpop.f32.mrf.mxu0
      %v249 = vadd.f32 0.0, %v248
      %250 = vmatmul.f32.gmra.mxu0 %v187
      %v251 = vpop.f32.mrf.mxu0
      %v252 = vadd.f32 0.0, %v251
      %253 = vmatmul.f32.gmra.mxu0 %v190
      %v254 = vpop.f32.mrf.mxu0
      %v255 = vadd.f32 0.0, %v254
      %256 = vmatmul.f32.gmra.mxu0 %v193
      %v257 = vpop.f32.mrf.mxu0
      %v258 = vadd.f32 0.0, %v257
      %259 = vmatmul.f32.gmra.mxu0 %v196
      %v260 = vpop.f32.mrf.mxu0
      %v261 = vadd.f32 0.0, %v260
      %262 = vmatmul.f32.gmra.mxu0 %v199
      %v263 = vpop.f32.mrf.mxu0
      %v264 = vadd.f32 0.0, %v263
      %265 = vmatmul.f32.gmra.mxu0 %v202
      %v266 = vpop.f32.mrf.mxu0
      %v267 = vadd.f32 0.0, %v266
      %268 = vmatmul.f32.gmra.mxu0 %v205
      %v269 = vpop.f32.mrf.mxu0
      %v270 = vadd.f32 0.0, %v269
      %271 = vmatmul.f32.gmra.mxu0 %v208
      %v272 = vpop.f32.mrf.mxu0
      %v273 = vadd.f32 0.0, %v272
      %274 = vdwg.mxu0
      %v275 = vpack.c.bf16 %v228, %v228
      %v276 = vpack.c.bf16 %v231, %v231
      %v277 = vpack.c.bf16 %v234, %v234
      %v278 = vpack.c.bf16 %v237, %v237
      %v279 = vpack.c.bf16 %v240, %v240
      %v280 = vpack.c.bf16 %v243, %v243
      %v281 = vpack.c.bf16 %v246, %v246
      %v282 = vpack.c.bf16 %v249, %v249
      %v283 = vpack.c.bf16 %v252, %v252
      %v284 = vpack.c.bf16 %v255, %v255
      %v285 = vpack.c.bf16 %v258, %v258
      %v286 = vpack.c.bf16 %v261, %v261
      %v287 = vpack.c.bf16 %v264, %v264
      %v288 = vpack.c.bf16 %v267, %v267
      %v289 = vpack.c.bf16 %v270, %v270
      %v290 = vpack.c.bf16 %v273, %v273
      %vm291 = vcmask 257024
      %292 = vst.msk [vmem:[%s143] sm:$0xf] %vm291, %v275
      %293 = vst.msk [vmem:[%s143 + $0x4] sm:$0xf] %vm291, %v276
      %294 = vst.msk [vmem:[%s143 + $0x8] sm:$0xf] %vm291, %v277
      %295 = vst.msk [vmem:[%s143 + $0xc] sm:$0xf] %vm291, %v278
      %296 = vst.msk [vmem:[%s143 + $0x10] sm:$0xf] %vm291, %v279
      %297 = vst.msk [vmem:[%s143 + $0x14] sm:$0xf] %vm291, %v280
      %298 = vst.msk [vmem:[%s143 + $0x18] sm:$0xf] %vm291, %v281
      %299 = vst.msk [vmem:[%s143 + $0x1c] sm:$0xf] %vm291, %v282
      %300 = vst.msk [vmem:[%s143 + $0x20] sm:$0xf] %vm291, %v283
      %301 = vst.msk [vmem:[%s143 + $0x24] sm:$0xf] %vm291, %v284
      %302 = vst.msk [vmem:[%s143 + $0x28] sm:$0xf] %vm291, %v285
      %303 = vst.msk [vmem:[%s143 + $0x2c] sm:$0xf] %vm291, %v286
      %304 = vst.msk [vmem:[%s143 + $0x30] sm:$0xf] %vm291, %v287
      %305 = vst.msk [vmem:[%s143 + $0x34] sm:$0xf] %vm291, %v288
      %306 = vst.msk [vmem:[%s143 + $0x38] sm:$0xf] %vm291, %v289
      %307 = vst.msk [vmem:[%s143 + $0x3c] sm:$0xf] %vm291, %v290
      %p308 = scmp.lt.s32.totalorder %s13, 1
      %s309 = scalar_select %p308, %s13, 1
      %s310 = smul.addr %s309, 16
      %s311 = smul.addr %s310, 4
      %s312 = scalar_lea.vmem %s2, %s311
      // Predicated region
      $region29: #{tpu_custom_call.1} parent=27 // pred_check
        %p313 = pneg %p78
      $region30: #{tpu_custom_call.1} parent=27 // pred_check_branch
        %315 = sbr.rel (%p313) target = $region32
      $region31: #{tpu_custom_call.1} parent=27 // pred_region
        _
      $region32: #{tpu_custom_call.1} parent=27 // pred_fallthru
        _
    $region28: #{tpu_custom_call.1} parent=5 // pred_fallthru
      _
    %p316 = scmp.le.s32.totalorder 2, %s8
    // Predicated region
    $region33: #{tpu_custom_call.1} parent=5 // pred_check
      %p317 = pneg %p316
    $region34: #{tpu_custom_call.1} parent=5 // pred_check_branch
      %319 = sbr.rel (%p317) target = $region36
    $region35: #{tpu_custom_call.1} parent=5 // pred_region
      %s320 = ssub.s32 %s8, 2
      // Predicated region
      $region37: #{tpu_custom_call.1} parent=35 // pred_check
        %p321 = pneg %p84
      $region38: #{tpu_custom_call.1} parent=35 // pred_check_branch
        %323 = sbr.rel (%p321) target = $region40
      $region39: #{tpu_custom_call.1} parent=35 // pred_region
        %p324 = scmp.lt.s32.totalorder %s14, 1
        %s325 = scalar_select %p324, %s14, 1
        %s326 = smul.addr %s325, 16
        %s327 = smul.addr %s326, 4
        %s328 = scalar_lea.vmem %s2, %s327
      $region40: #{tpu_custom_call.1} parent=35 // pred_fallthru
        _
    $region36: #{tpu_custom_call.1} parent=5 // pred_fallthru
      _
  $region6: #{tpu_custom_call.1} parent=0 // loop_footer
    %s12 = sadd.s32 1, %s8
  $region7: #{tpu_custom_call.1} parent=0 // loop_footer_branch
    %7 = sbr.rel target = $region3
  $region8: #{tpu_custom_call.1} parent=0 // loop_exit
    _

</llo_original>
